<compile_context>
chip_gen: v7x
topology: tpu7x:2x2x1
jax: 0.10.0
libtpu: 0.0.40
codegen_flags: <defaults>
</compile_context>

<pallas_src>
import functools

import jax
import jax.numpy as jnp
from jax.experimental import pallas as pl
from jax.experimental.pallas import tpu as pltpu

LN_EPS = 1e-5  # torch.nn.LayerNorm default

VMEM_TILING_BUDGET = 40 * 1024 * 1024   # conservative: fits v7x's 64 MiB/TC with headroom
VMEM_LIMIT_BYTES = 56 * 1024 * 1024


def _round_up(x, m):
    return (x + m - 1) // m * m


def _ln_epilogue(z, gamma, beta, out_dtype):
    """Fused single-pass LayerNorm over the last axis of f32 z."""
    inv_d = 1.0 / z.shape[-1]
    mean = jnp.sum(z, axis=-1, keepdims=True) * inv_d
    meansq = jnp.sum(z * z, axis=-1, keepdims=True) * inv_d
    var = jnp.maximum(meansq - mean * mean, 0.0)
    norm = (z - mean) * jax.lax.rsqrt(var + LN_EPS)
    return (norm * gamma + beta).astype(out_dtype)


def _ffn_kernel_resident(x_ref, w1_ref, b1_ref, w2_ref, b2_ref, gamma_ref, beta_ref, o_ref):
    # x_ref: (tm, d_in); w1_ref: (d_in, d_hid) resident; w2_ref: (d_hid, d_in) resident.
    x = x_ref[...]
    h = jnp.dot(x, w1_ref[...], preferred_element_type=jnp.float32)
    h = jnp.maximum(h + b1_ref[...].astype(jnp.float32), 0.0)
    y = jnp.dot(h.astype(w2_ref.dtype), w2_ref[...], preferred_element_type=jnp.float32)
    # dropout: eval mode -> identity
    z = y + b2_ref[...].astype(jnp.float32) + x.astype(jnp.float32)
    o_ref[...] = _ln_epilogue(z, gamma_ref[...].astype(jnp.float32),
                              beta_ref[...].astype(jnp.float32), o_ref.dtype)


def _ffn_kernel_tiled(x_ref, w1_ref, b1_ref, w2_ref, b2_ref, gamma_ref, beta_ref, o_ref,
                      acc_ref):
    # Hidden dimension tiled along grid axis 1; acc_ref is the (tm, d_in) f32 accumulator.
    k = pl.program_id(1)
    nk = pl.num_programs(1)

    x = x_ref[...]
    h = jnp.dot(x, w1_ref[...], preferred_element_type=jnp.float32)        # (tm, tk)
    h = jnp.maximum(h + b1_ref[...].astype(jnp.float32), 0.0)
    partial = jnp.dot(h.astype(w2_ref.dtype), w2_ref[...],
                      preferred_element_type=jnp.float32)                  # (tm, d_in)

    @pl.when(k == 0)
    def _():
        acc_ref[...] = partial          # plain store: no zeros-init + "+=" round trip

    @pl.when(k > 0)
    def _():
        acc_ref[...] += partial

    @pl.when(k == nk - 1)
    def _():
        # dropout: eval mode -> identity
        z = acc_ref[...] + b2_ref[...].astype(jnp.float32) + x.astype(jnp.float32)
        o_ref[...] = _ln_epilogue(z, gamma_ref[...].astype(jnp.float32),
                                  beta_ref[...].astype(jnp.float32), o_ref.dtype)


@functools.partial(jax.jit, static_argnames=("tm", "tk", "compute_dtype", "force_tiled"))
def positionwise_ffn(x, w1, b1, w2, b2, gamma, beta, *, tm=512, tk=512,
                     compute_dtype=None, force_tiled=False):
    """x: (B, S, d_in). w1: (d_hid, d_in), w2: (d_in, d_hid) — torch Conv1d weights (k=1 squeezed)."""
    B, S, d_in = x.shape
    d_hid = w1.shape[0]
    N = B * S
    out_dtype = x.dtype
    cdt = jnp.dtype(compute_dtype) if compute_dtype is not None else jnp.dtype(x.dtype)

    w_bytes = cdt.itemsize
    x_bytes = cdt.itemsize
    o_bytes = jnp.dtype(out_dtype).itemsize

    # ---- row tiling: big tiles, but >= 2 tiles when possible so both v7x TCs get work ----
    tm = min(tm, _round_up(N, 8))
    if N > 8 and _round_up(N, tm) // tm < 2:
        tm = _round_up((N + 1) // 2, 8)

    # ---- hidden dim padded to a multiple of 256 (v6e/v7x MXU is 256x256) ----
    d_hid_align = _round_up(d_hid, 256)

    # ---- path selection under a generation-aware VMEM budget (v7x: 64 MiB/TC) ----
    def resident_bytes(tm_):
        return (2 * 2 * d_in * d_hid_align * w_bytes        # W1T + W2T (count 2 buffers each)
                + 2 * tm_ * d_in * (x_bytes + o_bytes)       # double-buffered x / out tiles
                + tm_ * d_hid_align * 4                      # f32 h intermediate
                + tm_ * d_in * 4)                            # f32 z temporary

    def tiled_bytes(tm_, tk_):
        return (2 * 2 * d_in * tk_ * w_bytes                 # double-buffered W1T/W2T slices
                + 2 * tm_ * d_in * (x_bytes + o_bytes)
                + tm_ * d_in * 4                             # f32 accumulator scratch
                + tm_ * tk_ * 4)                             # f32 h intermediate

    use_resident = False
    if not force_tiled:
        tm_res = tm
        while resident_bytes(tm_res) > VMEM_TILING_BUDGET and tm_res > 128:
            tm_res = max(128, tm_res // 2)
        if resident_bytes(tm_res) <= VMEM_TILING_BUDGET:
            use_resident = True
            tm = min(tm, tm_res)

    if use_resident:
        d_hid_pad = d_hid_align
    else:
        tk = _round_up(max(128, min(tk, d_hid_align)), 128)
        while tiled_bytes(tm, tk) > VMEM_TILING_BUDGET and tk > 256:
            tk = max(256, tk - 256)
        while tiled_bytes(tm, tk) > VMEM_TILING_BUDGET and tm > 64:
            tm = max(64, tm // 2)    # extreme d_in fallback
        d_hid_pad = _round_up(d_hid_align, tk)

    n_pad = _round_up(N, tm)
    n_row_tiles = n_pad // tm

    # ---- operand prep (all one-time HBM work, amortized over every row tile) ----
    x2 = x.reshape(N, d_in).astype(cdt)
    if n_pad != N:
        x2 = jnp.pad(x2, ((0, n_pad - N), (0, 0)))

    # Transpose once in HBM -> in-kernel dots are canonical ((1,),(0,)) (no per-step vxpose).
    w1t = w1.T.astype(cdt)                     # (d_in, d_hid)
    w2t = w2.T.astype(cdt)                     # (d_hid, d_in)
    if d_hid_pad != d_hid:
        # Padded hidden units: relu(x @ 0 + 0) = 0 -> contribute nothing to the output.
        w1t = jnp.pad(w1t, ((0, 0), (0, d_hid_pad - d_hid)))
        w2t = jnp.pad(w2t, ((0, d_hid_pad - d_hid), (0, 0)))
        b1 = jnp.pad(b1, ((0, d_hid_pad - d_hid),))
    b1_r = b1.reshape(1, d_hid_pad)
    b2_r = b2.reshape(1, d_in)
    gamma_r = gamma.reshape(1, d_in)
    beta_r = beta.reshape(1, d_in)

    weight_reads = 1 if use_resident else n_row_tiles        # tiled path re-streams per row tile
    cost = pl.CostEstimate(
        flops=4 * n_pad * d_in * d_hid_pad,                  # two matmuls, 2*M*N*K each
        transcendentals=n_pad,                               # one rsqrt per row
        bytes_accessed=(n_pad * d_in * (x_bytes + o_bytes)
                        + weight_reads * 2 * d_in * d_hid_pad * w_bytes),
    )

    if use_resident:
        grid_spec = pltpu.PrefetchScalarGridSpec(
            num_scalar_prefetch=0,
            grid=(n_row_tiles,),
            in_specs=[
                pl.BlockSpec((tm, d_in), lambda i: (i, 0)),            # x rows
                pl.BlockSpec((d_in, d_hid_pad), lambda i: (0, 0)),     # W1T (resident)
                pl.BlockSpec((1, d_hid_pad), lambda i: (0, 0)),        # b1
                pl.BlockSpec((d_hid_pad, d_in), lambda i: (0, 0)),     # W2T (resident)
                pl.BlockSpec((1, d_in), lambda i: (0, 0)),             # b2
                pl.BlockSpec((1, d_in), lambda i: (0, 0)),             # gamma
                pl.BlockSpec((1, d_in), lambda i: (0, 0)),             # beta
            ],
            out_specs=pl.BlockSpec((tm, d_in), lambda i: (i, 0)),
        )
        kernel = _ffn_kernel_resident
        dim_sem = ("parallel",)
    else:
        grid_spec = pltpu.PrefetchScalarGridSpec(
            num_scalar_prefetch=0,
            grid=(n_row_tiles, d_hid_pad // tk),
            in_specs=[
                pl.BlockSpec((tm, d_in), lambda i, k: (i, 0)),         # x rows
                pl.BlockSpec((d_in, tk), lambda i, k: (0, k)),         # W1T hidden slice
                pl.BlockSpec((1, tk), lambda i, k: (0, k)),            # b1 hidden slice
                pl.BlockSpec((tk, d_in), lambda i, k: (k, 0)),         # W2T hidden slice
                pl.BlockSpec((1, d_in), lambda i, k: (0, 0)),          # b2
                pl.BlockSpec((1, d_in), lambda i, k: (0, 0)),          # gamma
                pl.BlockSpec((1, d_in), lambda i, k: (0, 0)),          # beta
            ],
            out_specs=pl.BlockSpec((tm, d_in), lambda i, k: (i, 0)),
            scratch_shapes=[pltpu.VMEM((tm, d_in), jnp.float32)],
        )
        kernel = _ffn_kernel_tiled
        dim_sem = ("parallel", "arbitrary")

    out = pl.pallas_call(
        kernel,
        out_shape=jax.ShapeDtypeStruct((n_pad, d_in), out_dtype),
        grid_spec=grid_spec,
        compiler_params=pltpu.CompilerParams(
            dimension_semantics=dim_sem,
            vmem_limit_bytes=VMEM_LIMIT_BYTES,
        ),
        cost_estimate=cost,
    )(x2, w1t, b1_r, w2t, b2_r, gamma_r, beta_r)

    return out[:N].reshape(B, S, d_in)


def _reference(x, w1, b1, w2, b2, gamma, beta):
    # plain-JAX reference matching the PyTorch forward (eval mode)
    h = jnp.maximum(jnp.einsum("bsd,hd->bsh", x, w1) + b1, 0.0)
    y = jnp.einsum("bsh,dh->bsd", h, w2) + b2
    z = y + x
    mean = jnp.mean(z, axis=-1, keepdims=True)
    var = jnp.mean((z - mean) ** 2, axis=-1, keepdims=True)
    return (z - mean) * jax.lax.rsqrt(var + LN_EPS) * gamma + beta


def _make_params(key, d_in, d_hid):
    k = jax.random.split(key, 5)
    # Conv1d(d_in, d_hid, 1).weight has shape (d_hid, d_in, 1) -> squeezed to (d_hid, d_in)
    w1 = jax.random.normal(k[0], (d_hid, d_in), jnp.float32) * (1.0 / jnp.sqrt(d_in))
    b1 = jax.random.normal(k[1], (d_hid,), jnp.float32) * 0.1
    w2 = jax.random.normal(k[2], (d_in, d_hid), jnp.float32) * (1.0 / jnp.sqrt(d_hid))
    b2 = jax.random.normal(k[3], (d_in,), jnp.float32) * 0.1
    gamma = 1.0 + 0.05 * jax.random.normal(k[4], (d_in,), jnp.float32)
    beta = jnp.zeros((d_in,), jnp.float32)
    return w1, b1, w2, b2, gamma, beta


if __name__ == "__main__":
    key = jax.random.PRNGKey(0)
    kx, kp, kp2 = jax.random.split(key, 3)

    # Small but lane-dense shapes; S=7 exercises the ragged-row padding + 2-row-tile split.
    B, S, d_in, d_hid = 2, 7, 128, 256
    x = jax.random.normal(kx, (B, S, d_in), jnp.float32)
    w1, b1, w2, b2, gamma, beta = _make_params(kp, d_in, d_hid)
    ref = _reference(x, w1, b1, w2, b2, gamma, beta)

    # 1) Resident-weight path (default).
    out = jax.block_until_ready(positionwise_ffn(x, w1, b1, w2, b2, gamma, beta))
    assert out.shape == (B, S, d_in)
    assert jnp.allclose(out, ref, atol=1e-4, rtol=1e-4), "resident path mismatch"

    # 2) Forced hidden-tiled path with multi-step accumulation (tk=128 < d_hid).
    out2 = jax.block_until_ready(
        positionwise_ffn(x, w1, b1, w2, b2, gamma, beta, tk=128, force_tiled=True))
    assert jnp.allclose(out2, ref, atol=1e-4, rtol=1e-4), "tiled path mismatch"

    # 3) bf16 MXU path for an f32 model: f32 accumulation, f32 residual/LN tail.
    out3 = jax.block_until_ready(
        positionwise_ffn(x, w1, b1, w2, b2, gamma, beta, compute_dtype=jnp.bfloat16))
    assert out3.dtype == x.dtype
    assert jnp.allclose(out3, ref, atol=1.5e-1, rtol=1.5e-1), "bf16 path mismatch"

    # 4) Hidden dim not a multiple of 256 (pads to 256): padded units must contribute zero.
    d_hid2 = 192
    w1b, b1b, w2b, b2b, gb, bb = _make_params(kp2, d_in, d_hid2)
    ref4 = _reference(x, w1b, b1b, w2b, b2b, gb, bb)
    out4 = jax.block_until_ready(positionwise_ffn(x, w1b, b1b, w2b, b2b, gb, bb))
    assert jnp.allclose(out4, ref4, atol=1e-4, rtol=1e-4), "hidden-padding path mismatch"

    print("KERNEL_OK")
</pallas_src>

<mosaic_0001>
module attributes {stable_mosaic.version = 11 : i64} {
  func.func @_ffn_kernel_resident(%arg0: i32, %arg1: memref<8x128xf32, #tpu.memory_space<vmem>>, %arg2: memref<128x256xf32, #tpu.memory_space<vmem>>, %arg3: memref<1x256xf32, #tpu.memory_space<vmem>>, %arg4: memref<256x128xf32, #tpu.memory_space<vmem>>, %arg5: memref<1x128xf32, #tpu.memory_space<vmem>>, %arg6: memref<1x128xf32, #tpu.memory_space<vmem>>, %arg7: memref<1x128xf32, #tpu.memory_space<vmem>>, %arg8: memref<8x128xf32, #tpu.memory_space<vmem>>) attributes {dimension_semantics = [#tpu.dimension_semantics<parallel>], iteration_bounds = array<i64: 2>, scalar_prefetch = 0 : i64, scratch_operands = 0 : i64, tpu.core_type = #tpu.core_type<tc>, window_params = [{transform_indices = @transform_0, window_bounds = array<i64: 8, 128>}, {pipeline_mode = #tpu.pipeline_mode<synchronous>, transform_indices = @transform_1, window_bounds = array<i64: 128, 256>}, {pipeline_mode = #tpu.pipeline_mode<synchronous>, transform_indices = @transform_2, window_bounds = array<i64: 1, 256>}, {pipeline_mode = #tpu.pipeline_mode<synchronous>, transform_indices = @transform_3, window_bounds = array<i64: 256, 128>}, {pipeline_mode = #tpu.pipeline_mode<synchronous>, transform_indices = @transform_4, window_bounds = array<i64: 1, 128>}, {pipeline_mode = #tpu.pipeline_mode<synchronous>, transform_indices = @transform_5, window_bounds = array<i64: 1, 128>}, {pipeline_mode = #tpu.pipeline_mode<synchronous>, transform_indices = @transform_6, window_bounds = array<i64: 1, 128>}, {transform_indices = @transform_7, window_bounds = array<i64: 8, 128>}]} {
    %c0 = arith.constant 0 : index
    %c0_0 = arith.constant 0 : index
    %0 = vector.load %arg1[%c0, %c0_0] : memref<8x128xf32, #tpu.memory_space<vmem>>, vector<8x128xf32>
    %c0_1 = arith.constant 0 : index
    %c0_2 = arith.constant 0 : index
    %1 = vector.load %arg2[%c0_1, %c0_2] : memref<128x256xf32, #tpu.memory_space<vmem>>, vector<128x256xf32>
    %cst = arith.constant dense<0.000000e+00> : vector<8x256xf32>
    %2 = tpu.matmul %0, %1, %cst {dimension_numbers = #tpu.dot_dimension_numbers<[1], [0], [0], [1], [0, 0, 1, 1], [], []>} : vector<8x128xf32>, vector<128x256xf32>, vector<8x256xf32> -> vector<8x256xf32>
    %c0_3 = arith.constant 0 : index
    %c0_4 = arith.constant 0 : index
    %3 = vector.load %arg3[%c0_3, %c0_4] : memref<1x256xf32, #tpu.memory_space<vmem>>, vector<1x256xf32>
    %4 = vector.broadcast %3 : vector<1x256xf32> to vector<8x256xf32>
    %5 = arith.addf %2, %4 : vector<8x256xf32>
    %cst_5 = arith.constant 0.000000e+00 : f32
    %6 = vector.broadcast %cst_5 : f32 to vector<8x256xf32>
    %7 = arith.maximumf %5, %6 : vector<8x256xf32>
    %c0_6 = arith.constant 0 : index
    %c0_7 = arith.constant 0 : index
    %8 = vector.load %arg4[%c0_6, %c0_7] : memref<256x128xf32, #tpu.memory_space<vmem>>, vector<256x128xf32>
    %cst_8 = arith.constant dense<0.000000e+00> : vector<8x128xf32>
    %9 = tpu.matmul %7, %8, %cst_8 {dimension_numbers = #tpu.dot_dimension_numbers<[1], [0], [0], [1], [0, 0, 1, 1], [], []>} : vector<8x256xf32>, vector<256x128xf32>, vector<8x128xf32> -> vector<8x128xf32>
    %c0_9 = arith.constant 0 : index
    %c0_10 = arith.constant 0 : index
    %10 = vector.load %arg5[%c0_9, %c0_10] : memref<1x128xf32, #tpu.memory_space<vmem>>, vector<1x128xf32>
    %11 = vector.broadcast %10 : vector<1x128xf32> to vector<8x128xf32>
    %12 = arith.addf %9, %11 : vector<8x128xf32>
    %13 = arith.addf %12, %0 : vector<8x128xf32>
    %c0_11 = arith.constant 0 : index
    %c0_12 = arith.constant 0 : index
    %14 = vector.load %arg6[%c0_11, %c0_12] : memref<1x128xf32, #tpu.memory_space<vmem>>, vector<1x128xf32>
    %c0_13 = arith.constant 0 : index
    %c0_14 = arith.constant 0 : index
    %15 = vector.load %arg7[%c0_13, %c0_14] : memref<1x128xf32, #tpu.memory_space<vmem>>, vector<1x128xf32>
    %cst_15 = arith.constant dense<0.000000e+00> : vector<8xf32>
    %16 = vector.multi_reduction <add>, %13, %cst_15 [1] : vector<8x128xf32> to vector<8xf32>
    %17 = vector.shape_cast %16 : vector<8xf32> to vector<8x1xf32>
    %cst_16 = arith.constant 7.812500e-03 : f32
    %18 = vector.broadcast %cst_16 : f32 to vector<8x1xf32>
    %19 = arith.mulf %17, %18 : vector<8x1xf32>
    %20 = arith.mulf %13, %13 : vector<8x128xf32>
    %cst_17 = arith.constant dense<0.000000e+00> : vector<8xf32>
    %21 = vector.multi_reduction <add>, %20, %cst_17 [1] : vector<8x128xf32> to vector<8xf32>
    %22 = vector.shape_cast %21 : vector<8xf32> to vector<8x1xf32>
    %cst_18 = arith.constant 7.812500e-03 : f32
    %23 = vector.broadcast %cst_18 : f32 to vector<8x1xf32>
    %24 = arith.mulf %22, %23 : vector<8x1xf32>
    %25 = arith.mulf %19, %19 : vector<8x1xf32>
    %26 = arith.subf %24, %25 : vector<8x1xf32>
    %cst_19 = arith.constant 0.000000e+00 : f32
    %27 = vector.broadcast %cst_19 : f32 to vector<8x1xf32>
    %28 = arith.maximumf %26, %27 : vector<8x1xf32>
    %29 = vector.broadcast %19 : vector<8x1xf32> to vector<8x128xf32>
    %30 = arith.subf %13, %29 : vector<8x128xf32>
    %cst_20 = arith.constant 9.99999974E-6 : f32
    %31 = vector.broadcast %cst_20 : f32 to vector<8x1xf32>
    %32 = arith.addf %28, %31 : vector<8x1xf32>
    %33 = math.rsqrt %32 : vector<8x1xf32>
    %34 = vector.broadcast %33 : vector<8x1xf32> to vector<8x128xf32>
    %35 = arith.mulf %30, %34 : vector<8x128xf32>
    %36 = vector.broadcast %14 : vector<1x128xf32> to vector<8x128xf32>
    %37 = arith.mulf %35, %36 : vector<8x128xf32>
    %38 = vector.broadcast %15 : vector<1x128xf32> to vector<8x128xf32>
    %39 = arith.addf %37, %38 : vector<8x128xf32>
    %c0_21 = arith.constant 0 : index
    %c0_22 = arith.constant 0 : index
    %40 = vector.load %arg8[%c0_21, %c0_22] : memref<8x128xf32, #tpu.memory_space<vmem>>, vector<8x128xf32>
    tpu.vector_store %arg8[%c0_21, %c0_22], %39 {strides = array<i32>} : memref<8x128xf32, #tpu.memory_space<vmem>>, vector<8x128xf32>,
    return
  }
  func.func @transform_0(%arg0: i32) -> (i32, i32) {
    %c0_i32 = arith.constant 0 : i32
    %c0_i32_0 = arith.constant 0 : i32
    return %arg0, %c0_i32 : i32, i32
  }
  func.func @transform_1(%arg0: i32) -> (i32, i32) {
    %c0_i32 = arith.constant 0 : i32
    %c0_i32_0 = arith.constant 0 : i32
    %c0_i32_1 = arith.constant 0 : i32
    return %c0_i32, %c0_i32_0 : i32, i32
  }
  func.func @transform_2(%arg0: i32) -> (i32, i32) {
    %c0_i32 = arith.constant 0 : i32
    %c0_i32_0 = arith.constant 0 : i32
    %c0_i32_1 = arith.constant 0 : i32
    return %c0_i32, %c0_i32_0 : i32, i32
  }
  func.func @transform_3(%arg0: i32) -> (i32, i32) {
    %c0_i32 = arith.constant 0 : i32
    %c0_i32_0 = arith.constant 0 : i32
    %c0_i32_1 = arith.constant 0 : i32
    return %c0_i32, %c0_i32_0 : i32, i32
  }
  func.func @transform_4(%arg0: i32) -> (i32, i32) {
    %c0_i32 = arith.constant 0 : i32
    %c0_i32_0 = arith.constant 0 : i32
    %c0_i32_1 = arith.constant 0 : i32
    return %c0_i32, %c0_i32_0 : i32, i32
  }
  func.func @transform_5(%arg0: i32) -> (i32, i32) {
    %c0_i32 = arith.constant 0 : i32
    %c0_i32_0 = arith.constant 0 : i32
    %c0_i32_1 = arith.constant 0 : i32
    return %c0_i32, %c0_i32_0 : i32, i32
  }
  func.func @transform_6(%arg0: i32) -> (i32, i32) {
    %c0_i32 = arith.constant 0 : i32
    %c0_i32_0 = arith.constant 0 : i32
    %c0_i32_1 = arith.constant 0 : i32
    return %c0_i32, %c0_i32_0 : i32, i32
  }
  func.func @transform_7(%arg0: i32) -> (i32, i32) {
    %c0_i32 = arith.constant 0 : i32
    %c0_i32_0 = arith.constant 0 : i32
    return %arg0, %c0_i32 : i32, i32
  }
}

</mosaic_0001>

<llo_original>
// kernel: positionwise_ffn.1
$region0: #{positionwise_ffn.1}
  #allocation0 [shape = 'u32[]', space=smem, size = 0x4, offset = 0x4, fixed_abs, tag = 'smem constant byte address 0x4 - core index']
  #allocation1 [shape = 'u32[144,128]{1,0:T(1,128)}', space=vmem, size = 0x12000, scoped, tag = 'internal scratch']
  %s0 = inlined_call_operand.vmem [shape: f32[16,128], index: 0, kind: input, shape index: {}]
  %s1 = inlined_call_operand.vmem [shape: f32[128,256], index: 1, kind: input, shape index: {}]
  %s2 = inlined_call_operand.vmem [shape: f32[1,256], index: 2, kind: input, shape index: {}]
  %s3 = inlined_call_operand.vmem [shape: f32[256,128], index: 3, kind: input, shape index: {}]
  %s4 = inlined_call_operand.vmem [shape: f32[1,128], index: 4, kind: input, shape index: {}]
  %s5 = inlined_call_operand.vmem [shape: f32[1,128], index: 5, kind: input, shape index: {}]
  %s6 = inlined_call_operand.vmem [shape: f32[1,128], index: 6, kind: input, shape index: {}]
  %s7 = inlined_call_operand.vmem [shape: f32[16,128], index: 7, kind: output, shape index: {}]
  %s8 = sld [smem:[#allocation0]]
  $region61: #{positionwise_ffn.1} parent=0
    _
  %s10 = ssub.s32 1, %s8
  %s11 = scalar_select 0, %s10, %s8
  loop: start=0, step=1, limit=4
  $region2: #{positionwise_ffn.1} parent=0 // loop_pre_header
    _
  $region3: #{positionwise_ffn.1} parent=0 // loop_header
    %s13 = sphi 0, %s17
    %p14 = scmp.ge.s32.totalorder %s13, 4
    %s23 = sphi 0, %s25
    %s26 = sphi 0, %s23
    %s27 = sphi 0, %s26
    %s43 = sphi 0, %s27
    %s47 = sphi 0, %s47
    %s49 = sphi 0, %s47
    %s50 = sphi 0, %s49
    %s64 = sphi 0, %s50
    %s68 = sphi 0, %s68
    %s70 = sphi 0, %s68
    %s71 = sphi 0, %s70
    %s85 = sphi 0, %s71
    %s89 = sphi 0, %s89
    %s91 = sphi 0, %s89
    %s92 = sphi 0, %s91
    %s106 = sphi 0, %s92
    %s110 = sphi 0, %s110
    %s112 = sphi 0, %s110
    %s113 = sphi 0, %s112
    %s127 = sphi 0, %s113
    %s131 = sphi 0, %s131
    %s133 = sphi 0, %s131
    %s134 = sphi 0, %s133
    %s148 = sphi 0, %s134
    %s152 = sphi 0, %s152
    %s154 = sphi 0, %s152
    %s155 = sphi 0, %s154
    %s169 = sphi 0, %s155
    %s175 = sphi 0, %s177
    %s178 = sphi 0, %s175
    %s179 = sphi 0, %s178
    %s195 = sphi 0, %s179
  $region4: #{positionwise_ffn.1} parent=0 // loop_header_branch
    %16 = sbr.rel (%p14) target = $region8
  $region5: #{positionwise_ffn.1} parent=0 // loop_body
    %s18 = ssub.s32 %s13, 1
    %s19 = ssub.s32 %s13, 2
    %s20 = sadd.s32 %s13, 1
    %s21 = ssub.s32 %s13, %s20
    %p22 = scmp.eq.s32.totalorder %s21, 0
    %s24 = sadd.s32 %s23, 1
    %s25 = scalar_select %p22, %s23, %s24
    %p28 = pneg %p22
    %p29 = scmp.eq.s32.totalorder %s13, 1
    %p30 = por %p28, %p29
    %p31 = scmp.ne.s32.totalorder %s23, %s26
    %p32 = scmp.eq.s32.totalorder %s13, 0
    %p33 = por %p31, %p32
    %p34 = scmp.ne.s32.totalorder %s23, %s26
    %p35 = scmp.eq.s32.totalorder %s18, 1
    %p36 = por %p34, %p35
    %p37 = scmp.ne.s32.totalorder %s26, %s27
    %p38 = scmp.eq.s32.totalorder %s18, 0
    %p39 = por %p37, %p38
    %p40 = scmp.ne.s32.totalorder %s26, %s27
    %p41 = scmp.eq.s32.totalorder %s19, 1
    %p42 = por %p40, %p41
    %p44 = scmp.ne.s32.totalorder %s27, %s43
    %p45 = scmp.eq.s32.totalorder %s19, 0
    %p46 = por %p44, %p45
    %s48 = sadd.s32 %s47, 1
    %p51 = scmp.eq.s32.totalorder %s13, 1
    %p52 = scmp.ne.s32.totalorder %s47, %s49
    %p53 = scmp.eq.s32.totalorder %s13, 0
    %p54 = por %p52, %p53
    %p55 = scmp.ne.s32.totalorder %s47, %s49
    %p56 = scmp.eq.s32.totalorder %s18, 1
    %p57 = por %p55, %p56
    %p58 = scmp.ne.s32.totalorder %s49, %s50
    %p59 = scmp.eq.s32.totalorder %s18, 0
    %p60 = por %p58, %p59
    %p61 = scmp.ne.s32.totalorder %s49, %s50
    %p62 = scmp.eq.s32.totalorder %s19, 1
    %p63 = por %p61, %p62
    %p65 = scmp.ne.s32.totalorder %s50, %s64
    %p66 = scmp.eq.s32.totalorder %s19, 0
    %p67 = por %p65, %p66
    %s69 = sadd.s32 %s68, 1
    %p72 = scmp.eq.s32.totalorder %s13, 1
    %p73 = scmp.ne.s32.totalorder %s68, %s70
    %p74 = scmp.eq.s32.totalorder %s13, 0
    %p75 = por %p73, %p74
    %p76 = scmp.ne.s32.totalorder %s68, %s70
    %p77 = scmp.eq.s32.totalorder %s18, 1
    %p78 = por %p76, %p77
    %p79 = scmp.ne.s32.totalorder %s70, %s71
    %p80 = scmp.eq.s32.totalorder %s18, 0
    %p81 = por %p79, %p80
    %p82 = scmp.ne.s32.totalorder %s70, %s71
    %p83 = scmp.eq.s32.totalorder %s19, 1
    %p84 = por %p82, %p83
    %p86 = scmp.ne.s32.totalorder %s71, %s85
    %p87 = scmp.eq.s32.totalorder %s19, 0
    %p88 = por %p86, %p87
    %s90 = sadd.s32 %s89, 1
    %p93 = scmp.eq.s32.totalorder %s13, 1
    %p94 = scmp.ne.s32.totalorder %s89, %s91
    %p95 = scmp.eq.s32.totalorder %s13, 0
    %p96 = por %p94, %p95
    %p97 = scmp.ne.s32.totalorder %s89, %s91
    %p98 = scmp.eq.s32.totalorder %s18, 1
    %p99 = por %p97, %p98
    %p100 = scmp.ne.s32.totalorder %s91, %s92
    %p101 = scmp.eq.s32.totalorder %s18, 0
    %p102 = por %p100, %p101
    %p103 = scmp.ne.s32.totalorder %s91, %s92
    %p104 = scmp.eq.s32.totalorder %s19, 1
    %p105 = por %p103, %p104
    %p107 = scmp.ne.s32.totalorder %s92, %s106
    %p108 = scmp.eq.s32.totalorder %s19, 0
    %p109 = por %p107, %p108
    %s111 = sadd.s32 %s110, 1
    %p114 = scmp.eq.s32.totalorder %s13, 1
    %p115 = scmp.ne.s32.totalorder %s110, %s112
    %p116 = scmp.eq.s32.totalorder %s13, 0
    %p117 = por %p115, %p116
    %p118 = scmp.ne.s32.totalorder %s110, %s112
    %p119 = scmp.eq.s32.totalorder %s18, 1
    %p120 = por %p118, %p119
    %p121 = scmp.ne.s32.totalorder %s112, %s113
    %p122 = scmp.eq.s32.totalorder %s18, 0
    %p123 = por %p121, %p122
    %p124 = scmp.ne.s32.totalorder %s112, %s113
    %p125 = scmp.eq.s32.totalorder %s19, 1
    %p126 = por %p124, %p125
    %p128 = scmp.ne.s32.totalorder %s113, %s127
    %p129 = scmp.eq.s32.totalorder %s19, 0
    %p130 = por %p128, %p129
    %s132 = sadd.s32 %s131, 1
    %p135 = scmp.eq.s32.totalorder %s13, 1
    %p136 = scmp.ne.s32.totalorder %s131, %s133
    %p137 = scmp.eq.s32.totalorder %s13, 0
    %p138 = por %p136, %p137
    %p139 = scmp.ne.s32.totalorder %s131, %s133
    %p140 = scmp.eq.s32.totalorder %s18, 1
    %p141 = por %p139, %p140
    %p142 = scmp.ne.s32.totalorder %s133, %s134
    %p143 = scmp.eq.s32.totalorder %s18, 0
    %p144 = por %p142, %p143
    %p145 = scmp.ne.s32.totalorder %s133, %s134
    %p146 = scmp.eq.s32.totalorder %s19, 1
    %p147 = por %p145, %p146
    %p149 = scmp.ne.s32.totalorder %s134, %s148
    %p150 = scmp.eq.s32.totalorder %s19, 0
    %p151 = por %p149, %p150
    %s153 = sadd.s32 %s152, 1
    %p156 = scmp.eq.s32.totalorder %s13, 1
    %p157 = scmp.ne.s32.totalorder %s152, %s154
    %p158 = scmp.eq.s32.totalorder %s13, 0
    %p159 = por %p157, %p158
    %p160 = scmp.ne.s32.totalorder %s152, %s154
    %p161 = scmp.eq.s32.totalorder %s18, 1
    %p162 = por %p160, %p161
    %p163 = scmp.ne.s32.totalorder %s154, %s155
    %p164 = scmp.eq.s32.totalorder %s18, 0
    %p165 = por %p163, %p164
    %p166 = scmp.ne.s32.totalorder %s154, %s155
    %p167 = scmp.eq.s32.totalorder %s19, 1
    %p168 = por %p166, %p167
    %p170 = scmp.ne.s32.totalorder %s155, %s169
    %p171 = scmp.eq.s32.totalorder %s19, 0
    %p172 = por %p170, %p171
    %s173 = ssub.s32 %s13, %s20
    %p174 = scmp.eq.s32.totalorder %s173, 0
    %s176 = sadd.s32 %s175, 1
    %s177 = scalar_select %p174, %s175, %s176
    %p180 = pneg %p174
    %p181 = scmp.eq.s32.totalorder %s13, 1
    %p182 = por %p180, %p181
    %p183 = scmp.ne.s32.totalorder %s175, %s178
    %p184 = scmp.eq.s32.totalorder %s13, 0
    %p185 = por %p183, %p184
    %p186 = scmp.ne.s32.totalorder %s175, %s178
    %p187 = scmp.eq.s32.totalorder %s18, 1
    %p188 = por %p186, %p187
    %p189 = scmp.ne.s32.totalorder %s178, %s179
    %p190 = scmp.eq.s32.totalorder %s18, 0
    %p191 = por %p189, %p190
    %p192 = scmp.ne.s32.totalorder %s178, %s179
    %p193 = scmp.eq.s32.totalorder %s19, 1
    %p194 = por %p192, %p193
    %p196 = scmp.ne.s32.totalorder %s179, %s195
    %p197 = scmp.eq.s32.totalorder %s19, 0
    %p198 = por %p196, %p197
    %p199 = scmp.le.s32.totalorder 1, %s13
    %p200 = scmp.lt.s32.totalorder %s13, 3
    %p201 = pnand %p199, %p200
    %p202 = pneg %p201
    // Predicated region
    $region9: #{positionwise_ffn.1} parent=5 // pred_check
      _
    $region10: #{positionwise_ffn.1} parent=5 // pred_check_branch
      %204 = sbr.rel (%p201) target = $region12
    $region11: #{positionwise_ffn.1} parent=5 // pred_region
      %s205 = ssub.s32 %s13, 1
      // Predicated region
      $region13: #{positionwise_ffn.1} parent=11 // pred_check
        %p206 = pneg %p60
      $region14: #{positionwise_ffn.1} parent=11 // pred_check_branch
        %208 = sbr.rel (%p206) target = $region16
      $region15: #{positionwise_ffn.1} parent=11 // pred_region
        _
      $region16: #{positionwise_ffn.1} parent=11 // pred_fallthru
        _
      // Predicated region
      $region17: #{positionwise_ffn.1} parent=11 // pred_check
        %p209 = pneg %p81
      $region18: #{positionwise_ffn.1} parent=11 // pred_check_branch
        %211 = sbr.rel (%p209) target = $region20
      $region19: #{positionwise_ffn.1} parent=11 // pred_region
        _
      $region20: #{positionwise_ffn.1} parent=11 // pred_fallthru
        _
      // Predicated region
      $region21: #{positionwise_ffn.1} parent=11 // pred_check
        %p212 = pneg %p102
      $region22: #{positionwise_ffn.1} parent=11 // pred_check_branch
        %214 = sbr.rel (%p212) target = $region24
      $region23: #{positionwise_ffn.1} parent=11 // pred_region
        _
      $region24: #{positionwise_ffn.1} parent=11 // pred_fallthru
        _
      // Predicated region
      $region25: #{positionwise_ffn.1} parent=11 // pred_check
        %p215 = pneg %p123
      $region26: #{positionwise_ffn.1} parent=11 // pred_check_branch
        %217 = sbr.rel (%p215) target = $region28
      $region27: #{positionwise_ffn.1} parent=11 // pred_region
        _
      $region28: #{positionwise_ffn.1} parent=11 // pred_fallthru
        _
      // Predicated region
      $region29: #{positionwise_ffn.1} parent=11 // pred_check
        %p218 = pneg %p144
      $region30: #{positionwise_ffn.1} parent=11 // pred_check_branch
        %220 = sbr.rel (%p218) target = $region32
      $region31: #{positionwise_ffn.1} parent=11 // pred_region
        _
      $region32: #{positionwise_ffn.1} parent=11 // pred_fallthru
        _
      // Predicated region
      $region33: #{positionwise_ffn.1} parent=11 // pred_check
        %p221 = pneg %p165
      $region34: #{positionwise_ffn.1} parent=11 // pred_check_branch
        %223 = sbr.rel (%p221) target = $region36
      $region35: #{positionwise_ffn.1} parent=11 // pred_region
        _
      $region36: #{positionwise_ffn.1} parent=11 // pred_fallthru
        _
    $region12: #{positionwise_ffn.1} parent=5 // pred_fallthru
      _
    %p224 = scmp.lt.s32.totalorder %s13, 2
    // Predicated region
    $region37: #{positionwise_ffn.1} parent=5 // pred_check
      %p225 = pneg %p224
    $region38: #{positionwise_ffn.1} parent=5 // pred_check_branch
      %227 = sbr.rel (%p225) target = $region40
    $region39: #{positionwise_ffn.1} parent=5 // pred_region
      // Predicated region
      $region41: #{positionwise_ffn.1} parent=39 // pred_check
        %p228 = pneg %p33
      $region42: #{positionwise_ffn.1} parent=39 // pred_check_branch
        %230 = sbr.rel (%p228) target = $region44
      $region43: #{positionwise_ffn.1} parent=39 // pred_region
        %p231 = scmp.lt.s32.totalorder %s13, 1
        %s232 = scalar_select %p231, %s13, 1
        %s233 = smul.addr %s232, 8
        %s234 = scalar_lea.vmem %s0, %s233
      $region44: #{positionwise_ffn.1} parent=39 // pred_fallthru
        _
    $region40: #{positionwise_ffn.1} parent=5 // pred_fallthru
      _
    %p235 = scmp.le.s32.totalorder 1, %s13
    %p236 = scmp.lt.s32.totalorder %s13, 3
    %p237 = pnand %p235, %p236
    %p238 = pneg %p237
    // Predicated region
    $region45: #{positionwise_ffn.1} parent=5 // pred_check
      _
    $region46: #{positionwise_ffn.1} parent=5 // pred_check_branch
      %240 = sbr.rel (%p237) target = $region48
    $region47: #{positionwise_ffn.1} parent=5 // pred_region
      %s241 = ssub.s32 %s13, 1
      %p242 = scmp.lt.s32.totalorder %s18, 1
      %s243 = scalar_select %p242, %s18, 1
      %s244 = smul.addr %s243, 8
      %s245 = scalar_lea.vmem %s0, %s244
      %p246 = pneg %p39
      %p247 = pneg %p36
      %p248 = pneg %p60
      %p249 = pneg %p57
      %p250 = pneg %p81
      %p251 = pneg %p78
      %p252 = pneg %p102
      %p253 = pneg %p99
      %p254 = pneg %p123
      %p255 = pneg %p120
      %p256 = pneg %p144
      %p257 = pneg %p141
      %p258 = pneg %p165
      %p259 = pneg %p162
      %p260 = pneg %p191
      %p261 = pneg %p188
      %p262 = scmp.lt.s32.totalorder %s18, 1
      %s263 = scalar_select %p262, %s18, 1
      %s264 = smul.addr %s263, 8
      %s265 = scalar_lea.vmem %s7, %s264
      %p266 = scmp.lt.s32.totalorder %s18, 1
      %s267 = scalar_select %p266, %s18, 1
      %s268 = smul.addr %s267, 8
      %s269 = scalar_lea.vmem %s0, %s268
      %p270 = scmp.lt.s32.totalorder %s18, 1
      %s271 = scalar_select %p270, %s18, 1
      %s272 = smul.addr %s271, 8
      %s273 = scalar_lea.vmem %s7, %s272
      %v274 = vld [vmem:[%s269] sm:$0xff]
      %v275 = vld [vmem:[%s1] sm:$0xff]
      %v276 = vld [vmem:[%s1 + $0x8] sm:$0xff]
      %v277 = vld [vmem:[%s1 + $0x10] sm:$0xff]
      %v278 = vld [vmem:[%s1 + $0x18] sm:$0xff]
      %v279 = vld [vmem:[%s1 + $0x20] sm:$0xff]
      %v280 = vld [vmem:[%s1 + $0x28] sm:$0xff]
      %v281 = vld [vmem:[%s1 + $0x30] sm:$0xff]
      %v282 = vld [vmem:[%s1 + $0x38] sm:$0xff]
      %v283 = vld [vmem:[%s1 + $0x40] sm:$0xff]
      %v284 = vld [vmem:[%s1 + $0x48] sm:$0xff]
      %v285 = vld [vmem:[%s1 + $0x50] sm:$0xff]
      %v286 = vld [vmem:[%s1 + $0x58] sm:$0xff]
      %v287 = vld [vmem:[%s1 + $0x60] sm:$0xff]
      %v288 = vld [vmem:[%s1 + $0x68] sm:$0xff]
      %v289 = vld [vmem:[%s1 + $0x70] sm:$0xff]
      %v290 = vld [vmem:[%s1 + $0x78] sm:$0xff]
      %v291 = vld [vmem:[%s1 + $0x80] sm:$0xff]
      %v292 = vld [vmem:[%s1 + $0x88] sm:$0xff]
      %v293 = vld [vmem:[%s1 + $0x90] sm:$0xff]
      %v294 = vld [vmem:[%s1 + $0x98] sm:$0xff]
      %v295 = vld [vmem:[%s1 + $0xa0] sm:$0xff]
      %v296 = vld [vmem:[%s1 + $0xa8] sm:$0xff]
      %v297 = vld [vmem:[%s1 + $0xb0] sm:$0xff]
      %v298 = vld [vmem:[%s1 + $0xb8] sm:$0xff]
      %v299 = vld [vmem:[%s1 + $0xc0] sm:$0xff]
      %v300 = vld [vmem:[%s1 + $0xc8] sm:$0xff]
      %v301 = vld [vmem:[%s1 + $0xd0] sm:$0xff]
      %v302 = vld [vmem:[%s1 + $0xd8] sm:$0xff]
      %v303 = vld [vmem:[%s1 + $0xe0] sm:$0xff]
      %v304 = vld [vmem:[%s1 + $0xe8] sm:$0xff]
      %v305 = vld [vmem:[%s1 + $0xf0] sm:$0xff]
      %v306 = vld [vmem:[%s1 + $0xf8] sm:$0xff]
      %v307 = vld [vmem:[%s2] sm:$0x3]
      %v309 = vlaneseq
      %v310 = vshrl.u32 %v309, 7
      %v311 = vsub.s32 0, %v310
      %v312 = vrot.slane %v307, %v311
      %v313 = vlaneseq
      %v314 = vshrl.u32 %v313, 7
      %v315 = vsub.s32 1, %v314
      %v316 = vrot.slane %v307, %v315
      %319 = vmatprep.subr.mxu0 %v276
      %320 = vmatpush1.msra.mxu0 %v275
      %321 = vmatprep.subr.mxu0 %v278
      %322 = vmatpush1.msra.mxu0 %v277
      %323 = vmatprep.subr.mxu0 %v280
      %324 = vmatpush1.msra.mxu0 %v279
      %325 = vmatprep.subr.mxu0 %v282
      %326 = vmatpush1.msra.mxu0 %v281
      %327 = vmatprep.subr.mxu0 %v284
      %328 = vmatpush1.msra.mxu0 %v283
      %329 = vmatprep.subr.mxu0 %v286
      %330 = vmatpush1.msra.mxu0 %v285
      %331 = vmatprep.subr.mxu0 %v288
      %332 = vmatpush1.msra.mxu0 %v287
      %333 = vmatprep.subr.mxu0 %v290
      %334 = vmatpush1.msra.mxu0 %v289
      %335 = vmatprep.subr.mxu0 %v292
      %336 = vmatpush1.msra.mxu0 %v291
      %337 = vmatprep.subr.mxu0 %v294
      %338 = vmatpush1.msra.mxu0 %v293
      %339 = vmatprep.subr.mxu0 %v296
      %340 = vmatpush1.msra.mxu0 %v295
      %341 = vmatprep.subr.mxu0 %v298
      %342 = vmatpush1.msra.mxu0 %v297
      %343 = vmatprep.subr.mxu0 %v300
      %344 = vmatpush1.msra.mxu0 %v299
      %345 = vmatprep.subr.mxu0 %v302
      %346 = vmatpush1.msra.mxu0 %v301
      %347 = vmatprep.subr.mxu0 %v304
      %348 = vmatpush1.msra.mxu0 %v303
      %349 = vmatprep.subr.mxu0 %v306
      %350 = vmatpush1.msra.mxu0 %v305
      %351 = vmatprep.subr.mxu0 0.0
      %352 = vmatpush1.msra.mxu0 0.0
      %353 = vmatprep.subr.mxu0 0.0
      %354 = vmatpush1.msra.mxu0 0.0
      %355 = vmatprep.subr.mxu0 0.0
      %356 = vmatpush1.msra.mxu0 0.0
      %357 = vmatprep.subr.mxu0 0.0
      %358 = vmatpush1.msra.mxu0 0.0
      %359 = vmatprep.subr.mxu0 0.0
      %360 = vmatpush1.msra.mxu0 0.0
      %361 = vmatprep.subr.mxu0 0.0
      %362 = vmatpush1.msra.mxu0 0.0
      %363 = vmatprep.subr.mxu0 0.0
      %364 = vmatpush1.msra.mxu0 0.0
      %365 = vmatprep.subr.mxu0 0.0
      %366 = vmatpush1.msra.mxu0 0.0
      %367 = vmatprep.subr.mxu0 0.0
      %368 = vmatpush1.msra.mxu0 0.0
      %369 = vmatprep.subr.mxu0 0.0
      %370 = vmatpush1.msra.mxu0 0.0
      %371 = vmatprep.subr.mxu0 0.0
      %372 = vmatpush1.msra.mxu0 0.0
      %373 = vmatprep.subr.mxu0 0.0
      %374 = vmatpush1.msra.mxu0 0.0
      %375 = vmatprep.subr.mxu0 0.0
      %376 = vmatpush1.msra.mxu0 0.0
      %377 = vmatprep.subr.mxu0 0.0
      %378 = vmatpush1.msra.mxu0 0.0
      %379 = vmatprep.subr.mxu0 0.0
      %380 = vmatpush1.msra.mxu0 0.0
      %381 = vmatprep.subr.mxu0 0.0
      %382 = vmatpush1.msra.mxu0 0.0
      %383 = vmatprep.mubr.f32.mxu0 0.0
      %384 = vmatmul.mubr.f32.gmra.mrb[0].mxu0 %v274
      %v385 = vpop.f32.mrb[0].mxu0
      %v386 = vadd.f32 %v312, %v385
      %v387 = vpop.f32.mrb[0].mxu0
      %v388 = vadd.f32 %v316, %v387
      %389 = vdwg.mxu0
      %v390 = vmax.f32 %v386, 0.0
      %v391 = vmax.f32 %v388, 0.0
      %v392 = vld [vmem:[%s3] sm:$0xff]
      %v393 = vld [vmem:[%s3 + $0x8] sm:$0xff]
      %v394 = vld [vmem:[%s3 + $0x10] sm:$0xff]
      %v395 = vld [vmem:[%s3 + $0x18] sm:$0xff]
      %v396 = vld [vmem:[%s3 + $0x20] sm:$0xff]
      %v397 = vld [vmem:[%s3 + $0x28] sm:$0xff]
      %v398 = vld [vmem:[%s3 + $0x30] sm:$0xff]
      %v399 = vld [vmem:[%s3 + $0x38] sm:$0xff]
      %v400 = vld [vmem:[%s3 + $0x40] sm:$0xff]
      %v401 = vld [vmem:[%s3 + $0x48] sm:$0xff]
      %v402 = vld [vmem:[%s3 + $0x50] sm:$0xff]
      %v403 = vld [vmem:[%s3 + $0x58] sm:$0xff]
      %v404 = vld [vmem:[%s3 + $0x60] sm:$0xff]
      %v405 = vld [vmem:[%s3 + $0x68] sm:$0xff]
      %v406 = vld [vmem:[%s3 + $0x70] sm:$0xff]
      %v407 = vld [vmem:[%s3 + $0x78] sm:$0xff]
      %v408 = vld [vmem:[%s3 + $0x80] sm:$0xff]
      %v409 = vld [vmem:[%s3 + $0x88] sm:$0xff]
      %v410 = vld [vmem:[%s3 + $0x90] sm:$0xff]
      %v411 = vld [vmem:[%s3 + $0x98] sm:$0xff]
      %v412 = vld [vmem:[%s3 + $0xa0] sm:$0xff]
      %v413 = vld [vmem:[%s3 + $0xa8] sm:$0xff]
      %v414 = vld [vmem:[%s3 + $0xb0] sm:$0xff]
      %v415 = vld [vmem:[%s3 + $0xb8] sm:$0xff]
      %v416 = vld [vmem:[%s3 + $0xc0] sm:$0xff]
      %v417 = vld [vmem:[%s3 + $0xc8] sm:$0xff]
      %v418 = vld [vmem:[%s3 + $0xd0] sm:$0xff]
      %v419 = vld [vmem:[%s3 + $0xd8] sm:$0xff]
      %v420 = vld [vmem:[%s3 + $0xe0] sm:$0xff]
      %v421 = vld [vmem:[%s3 + $0xe8] sm:$0xff]
      %v422 = vld [vmem:[%s3 + $0xf0] sm:$0xff]
      %v423 = vld [vmem:[%s3 + $0xf8] sm:$0xff]
      %v424 = vld [vmem:[%s4] sm:$0x1]
      %v426 = vlaneseq
      %v427 = vshrl.u32 %v426, 7
      %v428 = vsub.s32 0, %v427
      %v429 = vrot.slane %v424, %v428
      %431 = vmatprep.subr.mxu0 0.0
      %432 = vmatpush1.msra.mxu0 %v392
      %433 = vmatprep.subr.mxu0 0.0
      %434 = vmatpush1.msra.mxu0 %v393
      %435 = vmatprep.subr.mxu0 0.0
      %436 = vmatpush1.msra.mxu0 %v394
      %437 = vmatprep.subr.mxu0 0.0
      %438 = vmatpush1.msra.mxu0 %v395
      %439 = vmatprep.subr.mxu0 0.0
      %440 = vmatpush1.msra.mxu0 %v396
      %441 = vmatprep.subr.mxu0 0.0
      %442 = vmatpush1.msra.mxu0 %v397
      %443 = vmatprep.subr.mxu0 0.0
      %444 = vmatpush1.msra.mxu0 %v398
      %445 = vmatprep.subr.mxu0 0.0
      %446 = vmatpush1.msra.mxu0 %v399
      %447 = vmatprep.subr.mxu0 0.0
      %448 = vmatpush1.msra.mxu0 %v400
      %449 = vmatprep.subr.mxu0 0.0
      %450 = vmatpush1.msra.mxu0 %v401
      %451 = vmatprep.subr.mxu0 0.0
      %452 = vmatpush1.msra.mxu0 %v402
      %453 = vmatprep.subr.mxu0 0.0
      %454 = vmatpush1.msra.mxu0 %v403
      %455 = vmatprep.subr.mxu0 0.0
      %456 = vmatpush1.msra.mxu0 %v404
      %457 = vmatprep.subr.mxu0 0.0
      %458 = vmatpush1.msra.mxu0 %v405
      %459 = vmatprep.subr.mxu0 0.0
      %460 = vmatpush1.msra.mxu0 %v406
      %461 = vmatprep.subr.mxu0 0.0
      %462 = vmatpush1.msra.mxu0 %v407
      %463 = vmatprep.subr.mxu0 0.0
      %464 = vmatpush1.msra.mxu0 %v408
      %465 = vmatprep.subr.mxu0 0.0
      %466 = vmatpush1.msra.mxu0 %v409
      %467 = vmatprep.subr.mxu0 0.0
      %468 = vmatpush1.msra.mxu0 %v410
      %469 = vmatprep.subr.mxu0 0.0
      %470 = vmatpush1.msra.mxu0 %v411
      %471 = vmatprep.subr.mxu0 0.0
      %472 = vmatpush1.msra.mxu0 %v412
      %473 = vmatprep.subr.mxu0 0.0
      %474 = vmatpush1.msra.mxu0 %v413
      %475 = vmatprep.subr.mxu0 0.0
      %476 = vmatpush1.msra.mxu0 %v414
      %477 = vmatprep.subr.mxu0 0.0
      %478 = vmatpush1.msra.mxu0 %v415
      %479 = vmatprep.subr.mxu0 0.0
      %480 = vmatpush1.msra.mxu0 %v416
      %481 = vmatprep.subr.mxu0 0.0
      %482 = vmatpush1.msra.mxu0 %v417
      %483 = vmatprep.subr.mxu0 0.0
      %484 = vmatpush1.msra.mxu0 %v418
      %485 = vmatprep.subr.mxu0 0.0
      %486 = vmatpush1.msra.mxu0 %v419
      %487 = vmatprep.subr.mxu0 0.0
      %488 = vmatpush1.msra.mxu0 %v420
      %489 = vmatprep.subr.mxu0 0.0
      %490 = vmatpush1.msra.mxu0 %v421
      %491 = vmatprep.subr.mxu0 0.0
      %492 = vmatpush1.msra.mxu0 %v422
      %493 = vmatprep.subr.mxu0 0.0
      %494 = vmatpush1.msra.mxu0 %v423
      %495 = vmatprep.mubr.f32.mxu0 %v391
      %496 = vmatmul.mubr.f32.gmra.mrb[0].mxu0 %v390
      %v497 = vpop.f32.mrb[0].mxu0
      %v498 = vadd.f32 %v429, %v497
      %v499 = vpop.f32.mrb[0].mxu0
      %500 = vdwg.mxu0
      %v501 = vadd.f32 %v498, %v274
      %v502 = vld [vmem:[%s5] sm:$0x1]
      %v503 = vld [vmem:[%s6] sm:$0x1]
      %504 = vadd.xlane.f32.xlu0 %v501
      %v505 = vpop.xlane.xlu0 %504
      %v506 = vmul.f32 %v505, 0.0078125
      %v507 = vmul.f32 %v501, %v501
      %508 = vadd.xlane.f32.xlu0 %v507
      %v509 = vpop.xlane.xlu0 %508
      %v510 = vmul.f32 %v509, 0.0078125
      %v511 = vmul.f32 %v506, %v506
      %v512 = vsub.f32 %v510, %v511
      %v513 = vmax.f32 %v512, 0.0
      %v514 = vsub.f32 %v501, %v506
      %v515 = vadd.f32 %v513, 1e-05
      %v516 = vrsqrt.pop %v515
      %v517 = vmul.f32 %v514, %v516
      %v519 = vlaneseq
      %v520 = vshrl.u32 %v519, 7
      %v521 = vsub.s32 0, %v520
      %v522 = vrot.slane %v502, %v521
      %v524 = vmul.f32 %v517, %v522
      %v526 = vlaneseq
      %v527 = vshrl.u32 %v526, 7
      %v528 = vsub.s32 0, %v527
      %v529 = vrot.slane %v503, %v528
      %v531 = vadd.f32 %v524, %v529
      %532 = vst [vmem:[%s273] sm:$0xff] %v531
      %p533 = scmp.lt.s32.totalorder %s18, 1
      %s534 = scalar_select %p533, %s18, 1
      %s535 = smul.addr %s534, 8
      %s536 = scalar_lea.vmem %s7, %s535
      // Predicated region
      $region49: #{positionwise_ffn.1} parent=47 // pred_check
        %p537 = pneg %p188
      $region50: #{positionwise_ffn.1} parent=47 // pred_check_branch
        %539 = sbr.rel (%p537) target = $region52
      $region51: #{positionwise_ffn.1} parent=47 // pred_region
        _
      $region52: #{positionwise_ffn.1} parent=47 // pred_fallthru
        _
    $region48: #{positionwise_ffn.1} parent=5 // pred_fallthru
      _
    %p540 = scmp.le.s32.totalorder 2, %s13
    // Predicated region
    $region53: #{positionwise_ffn.1} parent=5 // pred_check
      %p541 = pneg %p540
    $region54: #{positionwise_ffn.1} parent=5 // pred_check_branch
      %543 = sbr.rel (%p541) target = $region56
    $region55: #{positionwise_ffn.1} parent=5 // pred_region
      %s544 = ssub.s32 %s13, 2
      // Predicated region
      $region57: #{positionwise_ffn.1} parent=55 // pred_check
        %p545 = pneg %p194
      $region58: #{positionwise_ffn.1} parent=55 // pred_check_branch
        %547 = sbr.rel (%p545) target = $region60
      $region59: #{positionwise_ffn.1} parent=55 // pred_region
        %p548 = scmp.lt.s32.totalorder %s19, 1
        %s549 = scalar_select %p548, %s19, 1
        %s550 = smul.addr %s549, 8
        %s551 = scalar_lea.vmem %s7, %s550
      $region60: #{positionwise_ffn.1} parent=55 // pred_fallthru
        _
    $region56: #{positionwise_ffn.1} parent=5 // pred_fallthru
      _
  $region6: #{positionwise_ffn.1} parent=0 // loop_footer
    %s17 = sadd.s32 1, %s13
  $region7: #{positionwise_ffn.1} parent=0 // loop_footer_branch
    %12 = sbr.rel target = $region3
  $region8: #{positionwise_ffn.1} parent=0 // loop_exit
    _

</llo_original>
